<compile_context>
chip_gen: v5e
topology: v5e:2x2
jax: 0.10.0
libtpu: 0.0.40
codegen_flags: <defaults>
</compile_context>

<pallas_src>
import jax
import jax.numpy as jnp
from jax.experimental import pallas as pl
from jax.experimental.pallas import tpu as pltpu


def _make_focal_kernel(gamma, tn, hard_labels):
    use_square = (gamma == 2)
    n_full = tn // 128
    rem = tn - n_full * 128

    def kernel(x_ref, t_ref, out_ref):
        j = pl.program_id(1)

        @pl.when(j == 0)
        def _():
            out_ref[...] = jnp.zeros_like(out_ref)

        x = x_ref[...].astype(jnp.float32)
        t = t_ref[...].astype(jnp.float32)

        # Shared transcendentals for both logsigmoid(x) and logsigmoid(-x).
        e = jnp.exp(-jnp.abs(x))                      # exp(-|x|)        (EUP)
        lg = jnp.log1p(e)                             # log1p(exp(-|x|)) (EUP)
        ls_pos = jnp.minimum(x, 0.0) - lg             # logsigmoid(x)
        ls_neg = -jnp.maximum(x, 0.0) - lg            # logsigmoid(-x)

        if use_square:
            # exp(2*logsigmoid(+/-x)) == sigmoid(+/-x)**2 : single approx
            # reciprocal on the EUP (own slot), no extra exps, no VALU N-R.
            r = pl.reciprocal(1.0 + e, approx=True)   # sigmoid(|x|)
            nonneg = x >= 0.0
            s_pos = jnp.where(nonneg, r, e * r)       # sigmoid(x)
            s_neg = jnp.where(nonneg, e * r, r)       # sigmoid(-x)
            f_neg = s_neg * s_neg                     # exp(gamma*ls_neg)
            f_pos = s_pos * s_pos                     # exp(gamma*ls_pos)
        else:
            f_neg = jnp.exp(gamma * ls_neg)
            f_pos = jnp.exp(gamma * ls_pos)

        if hard_labels:
            # Only valid when labels are strictly {0,1}; saves 2-3 VALU ops/elem.
            loss = -jnp.where(t > 0.5, ls_pos * f_neg, ls_neg * f_pos)
        else:
            loss = -t * ls_pos * f_neg - (1.0 - t) * ls_neg * f_pos

        # Lane-shaped accumulation: fold the tn/128 column vregs with plain VPU
        # adds.  No cross-lane (XLU) reduce, no scalar broadcast in the hot
        # loop; the final 128-lane reduce happens once, in the wrapper.
        if n_full > 0:
            acc = loss[:, 0:128]
            for c in range(1, n_full):
                acc = acc + loss[:, c * 128:(c + 1) * 128]
            if rem:
                # TODO(synk): tail path (n % 128 != 0) pays one small XLU reduce.
                tail = jnp.sum(loss[:, n_full * 128:], axis=-1, keepdims=True)
                lane = jax.lax.broadcasted_iota(jnp.int32, acc.shape, 1)
                acc = acc + jnp.where(lane == 0, tail, 0.0)
        else:
            tail = jnp.sum(loss, axis=-1, keepdims=True)
            lane = jax.lax.broadcasted_iota(jnp.int32, (loss.shape[0], 128), 1)
            acc = jnp.where(lane == 0, tail, 0.0)

        out_ref[...] += acc

    return kernel


def _pick_tiles(B, n, itemsize):
    """Large tiles (amortize ~0.35us/step) under an explicit VMEM budget."""
    min_tb = 16 if itemsize == 2 else 8
    tn = next((c for c in (4096, 2048, 1024, 512, 384, 256, 128) if n % c == 0), n)
    tb = next((c for c in (512, 256, 128, 64, 32, 16, 8)
               if c >= min_tb and B % c == 0), None)
    if tb is None:
        tb = B
    # v7x megacore: give both TensorCores a row tile when possible.
    while B // tb < 2 and tb >= 2 * min_tb:
        tb //= 2
    # VMEM budget: keep each input block <= ~4 MiB
    # (2 inputs x 2 pipeline buffers -> <= ~16 MiB resident).
    max_block_bytes = 4 << 20
    while tb * tn * itemsize > max_block_bytes and tb >= 2 * min_tb:
        tb //= 2
    while tb * tn * itemsize > max_block_bytes and tn % 256 == 0:
        tn //= 2
    return tb, tn


def focal_loss_with_weight(input_, target, gamma=2, reduction="mean",
                           hard_labels=False, tb=None, tn=None):
    """JAX/Pallas equivalent of FocalLossWithWeight.forward (reduction='mean')."""
    B, n = input_.shape
    assert target.shape == (B, n + 1), (input_.shape, target.shape)

    if reduction != "mean":
        # TODO(synk): 'none' reduction (full [B*n] wloss vector) not implemented.
        raise NotImplementedError("only reduction='mean' is implemented")

    in_itemsize = jnp.dtype(input_.dtype).itemsize
    lbl_itemsize = jnp.dtype(target.dtype).itemsize
    auto_tb, auto_tn = _pick_tiles(B, n, max(in_itemsize, lbl_itemsize))
    if tb is None:
        tb = auto_tb
    if tn is None:
        tn = auto_tn
    assert B % tb == 0 and n % tn == 0, (B, n, tb, tn)

    if tn % 128 == 0:
        # Column blocks cover exactly [0, n): labels are read straight out of
        # `target` (the trailing weight column is never touched) -> no copy.
        labels_arg = target
    else:
        # TODO(synk): n not a multiple of 128 falls back to a wrapper slice copy.
        labels_arg = target[:, :-1]

    nb = B // tb
    nn = n // tn

    # Explicit VMEM accounting: 2 inputs x 2 pipeline buffers + output buffers,
    # with margin, clamped below v7x's 64 MiB physical (raises v5e's 16 MiB
    # scoped default so the bigger tiles actually materialize there).
    block_bytes = tb * tn * (in_itemsize + lbl_itemsize)
    vmem_needed = 2 * block_bytes + 2 * tb * 128 * 4
    vmem_limit = int(min(max(vmem_needed + (8 << 20), 32 << 20), 56 << 20))

    cost = pl.CostEstimate(
        flops=20 * B * n,
        transcendentals=3 * B * n,
        bytes_accessed=B * n * (in_itemsize + lbl_itemsize) + B * 128 * 4,
    )

    # Unweighted per-row partial sums, folded to a lane-dense (B, 128) slab.
    partials = pl.pallas_call(
        _make_focal_kernel(gamma, tn, hard_labels),
        out_shape=jax.ShapeDtypeStruct((B, 128), jnp.float32),
        grid=(nb, nn),
        in_specs=[
            pl.BlockSpec((tb, tn), lambda i, j: (i, j)),   # logits tile
            pl.BlockSpec((tb, tn), lambda i, j: (i, j)),   # label tile (cols < n)
        ],
        out_specs=pl.BlockSpec((tb, 128), lambda i, j: (i, 0)),
        compiler_params=pltpu.CompilerParams(
            dimension_semantics=("parallel", "arbitrary"),
            vmem_limit_bytes=vmem_limit),
        cost_estimate=cost,
    )(input_, labels_arg)

    # Final cross-lane reduce + per-row weight multiply happen once, on B*128
    # and B elements respectively (hoisted out of the B*n hot loop).
    row_sums = jnp.sum(partials, axis=-1)                  # (B,)
    w = target[:, -1].astype(jnp.float32)                  # (B,)
    wsum = jnp.sum(row_sums * w)
    # n * mean(wloss) over B*n elements == wsum / B.
    return wsum / B


def _reference(input_, target, gamma=2.0):
    n = input_.shape[-1]
    labels = target[:, :-1].reshape(-1).astype(jnp.float32)
    weights = jnp.broadcast_to(target[:, -1:], target[:, :-1].shape)
    weights = weights.reshape(-1).astype(jnp.float32)
    x = input_.reshape(-1).astype(jnp.float32)
    ls_pos = jax.nn.log_sigmoid(x)
    ls_neg = jax.nn.log_sigmoid(-x)
    loss = (-labels * ls_pos * jnp.exp(gamma * ls_neg)
            - (1.0 - labels) * ls_neg * jnp.exp(gamma * ls_pos))
    return n * jnp.mean(loss * weights)


if __name__ == "__main__":
    key = jax.random.PRNGKey(0)
    k1, k2, k3 = jax.random.split(key, 3)

    B, N = 32, 512
    logits = jax.random.normal(k1, (B, N), dtype=jnp.float32)
    labels = (jax.random.uniform(k2, (B, N)) > 0.5).astype(jnp.float32)
    row_w = jax.random.uniform(k3, (B, 1), dtype=jnp.float32)
    target = jnp.concatenate([labels, row_w], axis=-1)      # [B, N+1]

    ref = _reference(logits, target)

    # Forced small tiles: exercises the multi-tile accumulation path
    # (grid 4x4: "parallel" row axis + "arbitrary" reduction axis).
    out = focal_loss_with_weight(logits, target, reduction="mean", tb=8, tn=128)
    out = jax.block_until_ready(out)
    assert jnp.allclose(out, ref, rtol=1e-3, atol=1e-3), (out, ref)

    # Auto-tiled path (tb shrinks so nb >= 2 for v7x megacore; tn = 512).
    out2 = focal_loss_with_weight(logits, target, reduction="mean")
    out2 = jax.block_until_ready(out2)
    assert jnp.allclose(out2, ref, rtol=1e-3, atol=1e-3), (out2, ref)

    print("KERNEL_OK")
</pallas_src>

<mosaic_0001>
module attributes {stable_mosaic.version = 11 : i64} {
  func.func @kernel(%arg0: i32, %arg1: i32, %arg2: memref<8x128xf32, #tpu.memory_space<vmem>>, %arg3: memref<8x128xf32, #tpu.memory_space<vmem>>, %arg4: memref<8x128xf32, #tpu.memory_space<vmem>>) attributes {dimension_semantics = [#tpu.dimension_semantics<parallel>, #tpu.dimension_semantics<arbitrary>], iteration_bounds = array<i64: 4, 4>, scalar_prefetch = 0 : i64, scratch_operands = 0 : i64, tpu.core_type = #tpu.core_type<tc>, window_params = [{transform_indices = @transform_0, window_bounds = array<i64: 8, 128>}, {transform_indices = @transform_1, window_bounds = array<i64: 8, 128>}, {transform_indices = @transform_2, window_bounds = array<i64: 8, 128>}]} {
    %c0_i32 = arith.constant 0 : i32
    %0 = arith.cmpi eq, %arg1, %c0_i32 : i32
    %1 = arith.extui %0 : i1 to i32
    %c0_i32_0 = arith.constant 0 : i32
    %2 = arith.cmpi ne, %1, %c0_i32_0 : i32
    scf.if %2 {
      %cst_15 = arith.constant 0.000000e+00 : f32
      %41 = vector.broadcast %cst_15 : f32 to vector<8x128xf32>
      %c0_16 = arith.constant 0 : index
      %c0_17 = arith.constant 0 : index
      %42 = vector.load %arg4[%c0_16, %c0_17] : memref<8x128xf32, #tpu.memory_space<vmem>>, vector<8x128xf32>
      tpu.vector_store %arg4[%c0_16, %c0_17], %41 {strides = array<i32>} : memref<8x128xf32, #tpu.memory_space<vmem>>, vector<8x128xf32>,
    } else {
    }
    %c0 = arith.constant 0 : index
    %c0_1 = arith.constant 0 : index
    %3 = vector.load %arg2[%c0, %c0_1] : memref<8x128xf32, #tpu.memory_space<vmem>>, vector<8x128xf32>
    %c0_2 = arith.constant 0 : index
    %c0_3 = arith.constant 0 : index
    %4 = vector.load %arg3[%c0_2, %c0_3] : memref<8x128xf32, #tpu.memory_space<vmem>>, vector<8x128xf32>
    %5 = math.absf %3 : vector<8x128xf32>
    %cst = arith.constant 0.000000e+00 : f32
    %6 = vector.broadcast %cst : f32 to vector<8x128xf32>
    %7 = arith.subf %6, %5 : vector<8x128xf32>
    %8 = math.exp %7 : vector<8x128xf32>
    %9 = math.log1p %8 : vector<8x128xf32>
    %cst_4 = arith.constant 0.000000e+00 : f32
    %10 = vector.broadcast %cst_4 : f32 to vector<8x128xf32>
    %11 = arith.minimumf %3, %10 : vector<8x128xf32>
    %12 = arith.subf %11, %9 : vector<8x128xf32>
    %cst_5 = arith.constant 0.000000e+00 : f32
    %13 = vector.broadcast %cst_5 : f32 to vector<8x128xf32>
    %14 = arith.maximumf %3, %13 : vector<8x128xf32>
    %cst_6 = arith.constant 0.000000e+00 : f32
    %15 = vector.broadcast %cst_6 : f32 to vector<8x128xf32>
    %16 = arith.subf %15, %14 : vector<8x128xf32>
    %17 = arith.subf %16, %9 : vector<8x128xf32>
    %cst_7 = arith.constant 1.000000e+00 : f32
    %18 = vector.broadcast %cst_7 : f32 to vector<8x128xf32>
    %19 = arith.addf %18, %8 : vector<8x128xf32>
    %20 = tpu.reciprocal %19 {approx = true} : vector<8x128xf32> -> vector<8x128xf32>
    %cst_8 = arith.constant 0.000000e+00 : f32
    %21 = vector.broadcast %cst_8 : f32 to vector<8x128xf32>
    %22 = arith.cmpf oge, %3, %21 : vector<8x128xf32>
    %23 = arith.mulf %8, %20 : vector<8x128xf32>
    %24 = arith.select %22, %20, %23 : vector<8x128xi1>, vector<8x128xf32>
    %25 = arith.mulf %8, %20 : vector<8x128xf32>
    %26 = arith.select %22, %25, %20 : vector<8x128xi1>, vector<8x128xf32>
    %27 = arith.mulf %26, %26 : vector<8x128xf32>
    %28 = arith.mulf %24, %24 : vector<8x128xf32>
    %cst_9 = arith.constant 0.000000e+00 : f32
    %29 = vector.broadcast %cst_9 : f32 to vector<8x128xf32>
    %30 = arith.subf %29, %4 : vector<8x128xf32>
    %31 = arith.mulf %30, %12 : vector<8x128xf32>
    %32 = arith.mulf %31, %27 : vector<8x128xf32>
    %cst_10 = arith.constant 1.000000e+00 : f32
    %33 = vector.broadcast %cst_10 : f32 to vector<8x128xf32>
    %34 = arith.subf %33, %4 : vector<8x128xf32>
    %35 = arith.mulf %34, %17 : vector<8x128xf32>
    %36 = arith.mulf %35, %28 : vector<8x128xf32>
    %37 = arith.subf %32, %36 : vector<8x128xf32>
    %c0_11 = arith.constant 0 : index
    %c0_12 = arith.constant 0 : index
    %38 = vector.load %arg4[%c0_11, %c0_12] : memref<8x128xf32, #tpu.memory_space<vmem>>, vector<8x128xf32>
    %39 = arith.addf %38, %37 : vector<8x128xf32>
    %c0_13 = arith.constant 0 : index
    %c0_14 = arith.constant 0 : index
    %40 = vector.load %arg4[%c0_13, %c0_14] : memref<8x128xf32, #tpu.memory_space<vmem>>, vector<8x128xf32>
    tpu.vector_store %arg4[%c0_13, %c0_14], %39 {strides = array<i32>} : memref<8x128xf32, #tpu.memory_space<vmem>>, vector<8x128xf32>,
    return
  }
  func.func @transform_0(%arg0: i32, %arg1: i32) -> (i32, i32) {
    %c0_i32 = arith.constant 0 : i32
    return %arg0, %arg1 : i32, i32
  }
  func.func @transform_1(%arg0: i32, %arg1: i32) -> (i32, i32) {
    %c0_i32 = arith.constant 0 : i32
    return %arg0, %arg1 : i32, i32
  }
  func.func @transform_2(%arg0: i32, %arg1: i32) -> (i32, i32) {
    %c0_i32 = arith.constant 0 : i32
    %c0_i32_0 = arith.constant 0 : i32
    return %arg0, %c0_i32 : i32, i32
  }
}

</mosaic_0001>

<llo_original>
// kernel: tpu_custom_call.1
$region0: #{tpu_custom_call.1}
  #allocation0 [shape = 'u32[]', space=smem, size = 0x4, offset = 0x4, fixed_abs, tag = 'smem constant byte address 0x4 - core index']
  #allocation1 [shape = 'u32[72,128]{1,0:T(1,128)}', space=vmem, size = 0x9000, scoped, tag = 'internal scratch']
  %s0 = inlined_call_operand.hbm [shape: f32[32,512], index: 0, kind: input, shape index: {}]
  %s1 = inlined_call_operand.hbm [shape: f32[32,513], index: 1, kind: input, shape index: {}]
  %s2 = inlined_call_operand.hbm [shape: f32[32,128], index: 2, kind: output, shape index: {}]
  %s3 = sld [smem:[#allocation0]]
  $region53: #{tpu_custom_call.1} parent=0
    _
  %s5 = ssub.s32 1, %s3
  %s6 = scalar_select 0, %s5, %s3
  $region1: #{tpu_custom_call.1} parent=0
    #allocation2 [shape = 'u8[8192]{0}', space=vmem, size = 0x2000, scoped, tag = 'input window, operand 0']
    #allocation3 [shape = 's32[2]{0}', space=sflag, size = 0x8, scoped, tag = 'scoped memory for tpu_custom_call.1']
    #allocation4 [shape = 's32[2]{0}', space=sflag, size = 0x8, scoped, tag = 'scoped memory for tpu_custom_call.1']
    #allocation5 [shape = 'u8[8192]{0}', space=vmem, size = 0x2000, scoped, tag = 'input window, operand 1']
    #allocation6 [shape = 's32[2]{0}', space=sflag, size = 0x8, scoped, tag = 'scoped memory for tpu_custom_call.1']
    #allocation7 [shape = 'u8[8192]{0}', space=vmem, size = 0x2000, scoped, tag = 'output window, operand 0']
    %7 = vsyncpa [#allocation3], 0
    %s8 = scalar_lea.sflag [#allocation3], 1
    %9 = vsyncpa %s8, 0
    %10 = vsyncpa [#allocation6], 0
    %s11 = scalar_lea.sflag [#allocation6], 1
    %12 = vsyncpa %s11, 0
    %13 = vsyncpa [#allocation4], 0
    %s14 = scalar_lea.sflag [#allocation4], 1
    %15 = vsyncpa %s14, 0
    loop: start=0, step=1, limit=18
    $region2: #{tpu_custom_call.1} parent=1 // loop_pre_header
      _
    $region3: #{tpu_custom_call.1} parent=1 // loop_header
      %s17 = sphi 0, %s21
      %p18 = scmp.ge.s32.totalorder %s17, 18
      %s24 = sphi 0, %s36
      %s25 = sphi 0, %s32
      %s26 = sphi 0, %s24
      %s27 = sphi 0, %s25
      %s28 = sphi 0, %s26
      %s29 = sphi 0, %s27
      %s41 = sphi 0, %s43
      %s44 = sphi 0, %s41
      %s45 = sphi 0, %s44
      %s61 = sphi 0, %s45
      %s69 = sphi 0, %s71
      %s72 = sphi 0, %s69
      %s73 = sphi 0, %s72
      %s89 = sphi 0, %s73
      %s95 = sphi 0, %s97
      %s98 = sphi 0, %s95
      %s99 = sphi 0, %s98
      %s115 = sphi 0, %s99
    $region4: #{tpu_custom_call.1} parent=1 // loop_header_branch
      %20 = sbr.rel (%p18) target = $region8
    $region5: #{tpu_custom_call.1} parent=1 // loop_body
      %s22 = ssub.s32 %s17, 1
      %s23 = ssub.s32 %s17, 2
      %s30 = sadd.s32 1, %s25
      %p31 = scmp.ge.s32.totalorder %s30, 4
      %s32 = scalar_select %p31, 0, %s30
      %s33 = sadd.s32 1, %s24
      %s34 = scalar_select %p31, %s33, %s24
      %p35 = scmp.ge.s32.totalorder %s34, 4
      %s36 = scalar_select %p35, 0, %s34
      %s37 = ssub.s32 %s24, %s36
      %s38 = ssub.s32 %s25, %s32
      %s39 = sor.u32 %s37, %s38
      %p40 = scmp.eq.s32.totalorder %s39, 0
      %s42 = sadd.s32 %s41, 1
      %s43 = scalar_select %p40, %s41, %s42
      %p46 = pneg %p40
      %p47 = scmp.eq.s32.totalorder %s17, 15
      %p48 = por %p46, %p47
      %p49 = scmp.ne.s32.totalorder %s41, %s44
      %p50 = scmp.eq.s32.totalorder %s17, 0
      %p51 = por %p49, %p50
      %p52 = scmp.ne.s32.totalorder %s41, %s44
      %p53 = scmp.eq.s32.totalorder %s22, 15
      %p54 = por %p52, %p53
      %p55 = scmp.ne.s32.totalorder %s44, %s45
      %p56 = scmp.eq.s32.totalorder %s22, 0
      %p57 = por %p55, %p56
      %p58 = scmp.ne.s32.totalorder %s44, %s45
      %p59 = scmp.eq.s32.totalorder %s23, 15
      %p60 = por %p58, %p59
      %p62 = scmp.ne.s32.totalorder %s45, %s61
      %p63 = scmp.eq.s32.totalorder %s23, 0
      %p64 = por %p62, %p63
      %s65 = ssub.s32 %s24, %s36
      %s66 = ssub.s32 %s25, %s32
      %s67 = sor.u32 %s65, %s66
      %p68 = scmp.eq.s32.totalorder %s67, 0
      %s70 = sadd.s32 %s69, 1
      %s71 = scalar_select %p68, %s69, %s70
      %p74 = pneg %p68
      %p75 = scmp.eq.s32.totalorder %s17, 15
      %p76 = por %p74, %p75
      %p77 = scmp.ne.s32.totalorder %s69, %s72
      %p78 = scmp.eq.s32.totalorder %s17, 0
      %p79 = por %p77, %p78
      %p80 = scmp.ne.s32.totalorder %s69, %s72
      %p81 = scmp.eq.s32.totalorder %s22, 15
      %p82 = por %p80, %p81
      %p83 = scmp.ne.s32.totalorder %s72, %s73
      %p84 = scmp.eq.s32.totalorder %s22, 0
      %p85 = por %p83, %p84
      %p86 = scmp.ne.s32.totalorder %s72, %s73
      %p87 = scmp.eq.s32.totalorder %s23, 15
      %p88 = por %p86, %p87
      %p90 = scmp.ne.s32.totalorder %s73, %s89
      %p91 = scmp.eq.s32.totalorder %s23, 0
      %p92 = por %p90, %p91
      %s93 = ssub.s32 %s24, %s36
      %p94 = scmp.eq.s32.totalorder %s93, 0
      %s96 = sadd.s32 %s95, 1
      %s97 = scalar_select %p94, %s95, %s96
      %p100 = pneg %p94
      %p101 = scmp.eq.s32.totalorder %s17, 15
      %p102 = por %p100, %p101
      %p103 = scmp.ne.s32.totalorder %s95, %s98
      %p104 = scmp.eq.s32.totalorder %s17, 0
      %p105 = por %p103, %p104
      %p106 = scmp.ne.s32.totalorder %s95, %s98
      %p107 = scmp.eq.s32.totalorder %s22, 15
      %p108 = por %p106, %p107
      %p109 = scmp.ne.s32.totalorder %s98, %s99
      %p110 = scmp.eq.s32.totalorder %s22, 0
      %p111 = por %p109, %p110
      %p112 = scmp.ne.s32.totalorder %s98, %s99
      %p113 = scmp.eq.s32.totalorder %s23, 15
      %p114 = por %p112, %p113
      %p116 = scmp.ne.s32.totalorder %s99, %s115
      %p117 = scmp.eq.s32.totalorder %s23, 0
      %p118 = por %p116, %p117
      %p119 = scmp.le.s32.totalorder 1, %s17
      %p120 = scmp.lt.s32.totalorder %s17, 17
      %p121 = pnand %p119, %p120
      %p122 = pneg %p121
      // Predicated region
      $region9: #{tpu_custom_call.1} parent=5 // pred_check
        _
      $region10: #{tpu_custom_call.1} parent=5 // pred_check_branch
        %124 = sbr.rel (%p121) target = $region12
      $region11: #{tpu_custom_call.1} parent=5 // pred_region
        %s125 = ssub.s32 %s17, 1
      $region12: #{tpu_custom_call.1} parent=5 // pred_fallthru
        _
      %p126 = scmp.lt.s32.totalorder %s17, 16
      // Predicated region
      $region13: #{tpu_custom_call.1} parent=5 // pred_check
        %p127 = pneg %p126
      $region14: #{tpu_custom_call.1} parent=5 // pred_check_branch
        %129 = sbr.rel (%p127) target = $region16
      $region15: #{tpu_custom_call.1} parent=5 // pred_region
        // Predicated region
        $region17: #{tpu_custom_call.1} parent=15 // pred_check
          %p130 = pneg %p51
        $region18: #{tpu_custom_call.1} parent=15 // pred_check_branch
          %132 = sbr.rel (%p130) target = $region20
        $region19: #{tpu_custom_call.1} parent=15 // pred_region
          %s133 = sand.u32 %s41, 1
          %s134 = scalar_lea.sflag [#allocation3], %s133
          %s135 = sand.u32 %s41, 1
          %s136 = smul.addr %s135, 8
          %s137 = scalar_lea.vmem [#allocation2], %s136
          %139 = vsyncadd %s134, 0
          %s140 = smul.addr %s24, 4
          %s141 = sadd.s32 %s25, %s140
          %s142 = smul.addr %s141, 8
          %s143 = scalar_lea.hbm %s0, %s142
          %s145 = sshll.u32 %s143, 4
          %s146 = int_to_ptr.hbm [resolvable:$true] %s145
          %s147 = sshll.u32 %s137, 4
          %s148 = int_to_ptr.vmem [resolvable:$true] %s147
          %150 = dma.hbm_to_vmem [thread:$0]  %s146, 128, %s148, %s134
        $region20: #{tpu_custom_call.1} parent=15 // pred_fallthru
          _
        // Predicated region
        $region21: #{tpu_custom_call.1} parent=15 // pred_check
          %p151 = pneg %p79
        $region22: #{tpu_custom_call.1} parent=15 // pred_check_branch
          %153 = sbr.rel (%p151) target = $region24
        $region23: #{tpu_custom_call.1} parent=15 // pred_region
          %s154 = sand.u32 %s69, 1
          %s155 = scalar_lea.sflag [#allocation6], %s154
          %s156 = sand.u32 %s69, 1
          %s157 = smul.addr %s156, 8
          %s158 = scalar_lea.vmem [#allocation5], %s157
          %160 = vsyncadd %s155, 0
          %s161 = smul.addr %s24, 5
          %s162 = sadd.s32 %s25, %s161
          %s163 = smul.addr %s162, 8
          %s164 = scalar_lea.hbm %s1, %s163
          %s166 = sshll.u32 %s164, 4
          %s167 = int_to_ptr.hbm [resolvable:$true] %s166
          %s168 = sshll.u32 %s158, 4
          %s169 = int_to_ptr.vmem [resolvable:$true] %s168
          %171 = dma.hbm_to_vmem [thread:$0]  %s167, 128, %s169, %s155
        $region24: #{tpu_custom_call.1} parent=15 // pred_fallthru
          _
      $region16: #{tpu_custom_call.1} parent=5 // pred_fallthru
        _
      %p172 = scmp.le.s32.totalorder 1, %s17
      %p173 = scmp.lt.s32.totalorder %s17, 17
      %p174 = pnand %p172, %p173
      %p175 = pneg %p174
      // Predicated region
      $region25: #{tpu_custom_call.1} parent=5 // pred_check
        _
      $region26: #{tpu_custom_call.1} parent=5 // pred_check_branch
        %177 = sbr.rel (%p174) target = $region28
      $region27: #{tpu_custom_call.1} parent=5 // pred_region
        %s178 = ssub.s32 %s17, 1
        %s179 = sand.u32 %s44, 1
        %s180 = scalar_lea.sflag [#allocation3], %s179
        %s181 = sand.u32 %s44, 1
        %s182 = smul.addr %s181, 8
        %s183 = scalar_lea.vmem [#allocation2], %s182
        // Predicated region
        $region29: #{tpu_custom_call.1} parent=27 // pred_check
          %p184 = pneg %p57
        $region30: #{tpu_custom_call.1} parent=27 // pred_check_branch
          %186 = sbr.rel (%p184) target = $region32
        $region31: #{tpu_custom_call.1} parent=27 // pred_region
          %188 = dma.done %s180, 128
        $region32: #{tpu_custom_call.1} parent=27 // pred_fallthru
          _
        %s189 = sand.u32 %s72, 1
        %s190 = scalar_lea.sflag [#allocation6], %s189
        %s191 = sand.u32 %s72, 1
        %s192 = smul.addr %s191, 8
        %s193 = scalar_lea.vmem [#allocation5], %s192
        // Predicated region
        $region33: #{tpu_custom_call.1} parent=27 // pred_check
          %p194 = pneg %p85
        $region34: #{tpu_custom_call.1} parent=27 // pred_check_branch
          %196 = sbr.rel (%p194) target = $region36
        $region35: #{tpu_custom_call.1} parent=27 // pred_region
          %198 = dma.done %s190, 128
        $region36: #{tpu_custom_call.1} parent=27 // pred_fallthru
          _
        %s199 = sand.u32 %s44, 1
        %s200 = scalar_lea.sflag [#allocation3], %s199
        %s201 = sand.u32 %s44, 1
        %s202 = smul.addr %s201, 8
        %s203 = scalar_lea.vmem [#allocation2], %s202
        %p204 = pneg %p57
        %p205 = pneg %p54
        %s206 = sand.u32 %s72, 1
        %s207 = scalar_lea.sflag [#allocation6], %s206
        %s208 = sand.u32 %s72, 1
        %s209 = smul.addr %s208, 8
        %s210 = scalar_lea.vmem [#allocation5], %s209
        %p211 = pneg %p85
        %p212 = pneg %p82
        %p213 = pneg %p111
        %p214 = pneg %p108
        %s215 = sand.u32 %s98, 1
        %s216 = scalar_lea.sflag [#allocation4], %s215
        %s217 = sand.u32 %s98, 1
        %s218 = smul.addr %s217, 8
        %s219 = scalar_lea.vmem [#allocation7], %s218
        %p220 = scmp.eq.s32.totalorder %s27, 0
        // Predicated region
        $region37: #{tpu_custom_call.1} parent=27 // pred_check
          %p221 = pneg %p220
        $region38: #{tpu_custom_call.1} parent=27 // pred_check_branch
          %223 = sbr.rel (%p221) target = $region40
        $region39: #{tpu_custom_call.1} parent=27 // pred_region
          %224 = vst [vmem:[%s219] sm:$0xff] 0.0
        $region40: #{tpu_custom_call.1} parent=27 // pred_fallthru
          _
        %v225 = vld [vmem:[%s183] sm:$0xff]
        %v226 = vld [vmem:[%s193] sm:$0xff]
        %v227 = vand.u32 2147483647, %v225
        %v228 = vsub.f32 0.0, %v227
        %v229 = vmul.f32 %v228, 1.442695
        %v230 = vpow.pop %v229
        %v231 = vadd.f32 %v230, 1.0
        %v232 = vlog2.pop %v231
        %v233 = vmul.f32 %v232, 0.6931472
        %v234 = vmul.f32 -0.5, %v230
        %v235 = vadd.f32 %v234, 1.0
        %v236 = vmul.f32 %v235, %v230
        %v237 = vand.u32 2147483647, %v230
        %vm238 = vcmp.lt.f32.partialorder %v237, 0.0004427343
        %v239 = vsel %vm238, %v236, %v233
        %v240 = vmin.f32 %v225, 0.0
        %v241 = vsub.f32 %v240, %v239
        %v242 = vmax.f32 %v225, 0.0
        %v243 = vsub.f32 0.0, %v242
        %v244 = vsub.f32 %v243, %v239
        %v245 = vadd.f32 %v230, 1.0
        %v246 = vrcp.pop %v245
        %vm247 = vcmp.ge.f32.partialorder %v225, 0.0
        %v248 = vmul.f32 %v230, %v246
        %v249 = vsel %vm247, %v246, %v248
        %v250 = vsel %vm247, %v248, %v246
        %v251 = vmul.f32 %v250, %v250
        %v252 = vmul.f32 %v249, %v249
        %v253 = vsub.f32 0.0, %v226
        %v254 = vmul.f32 %v253, %v241
        %v255 = vmul.f32 %v254, %v251
        %v256 = vsub.f32 1.0, %v226
        %v257 = vmul.f32 %v256, %v244
        %v258 = vmul.f32 %v257, %v252
        %v259 = vsub.f32 %v255, %v258
        %v260 = vld [vmem:[%s219] sm:$0xff]
        %v261 = vadd.f32 %v260, %v259
        %262 = vst [vmem:[%s219] sm:$0xff] %v261
        %s263 = sand.u32 %s98, 1
        %s264 = scalar_lea.sflag [#allocation4], %s263
        %s265 = sand.u32 %s98, 1
        %s266 = smul.addr %s265, 8
        %s267 = scalar_lea.vmem [#allocation7], %s266
        // Predicated region
        $region41: #{tpu_custom_call.1} parent=27 // pred_check
          %p268 = pneg %p108
        $region42: #{tpu_custom_call.1} parent=27 // pred_check_branch
          %270 = sbr.rel (%p268) target = $region44
        $region43: #{tpu_custom_call.1} parent=27 // pred_region
          %272 = vsyncadd %s264, 0
          %s273 = smul.addr %s26, 8
          %s274 = scalar_lea.hbm %s2, %s273
          %s276 = sshll.u32 %s267, 4
          %s277 = int_to_ptr.vmem [resolvable:$true] %s276
          %s278 = sshll.u32 %s274, 4
          %s279 = int_to_ptr.hbm [resolvable:$true] %s278
          %281 = dma.vmem_to_hbm [thread:$0]  %s277, 128, %s279, %s264
        $region44: #{tpu_custom_call.1} parent=27 // pred_fallthru
          _
      $region28: #{tpu_custom_call.1} parent=5 // pred_fallthru
        _
      %p282 = scmp.le.s32.totalorder 2, %s17
      // Predicated region
      $region45: #{tpu_custom_call.1} parent=5 // pred_check
        %p283 = pneg %p282
      $region46: #{tpu_custom_call.1} parent=5 // pred_check_branch
        %285 = sbr.rel (%p283) target = $region48
      $region47: #{tpu_custom_call.1} parent=5 // pred_region
        %s286 = ssub.s32 %s17, 2
        // Predicated region
        $region49: #{tpu_custom_call.1} parent=47 // pred_check
          %p287 = pneg %p114
        $region50: #{tpu_custom_call.1} parent=47 // pred_check_branch
          %289 = sbr.rel (%p287) target = $region52
        $region51: #{tpu_custom_call.1} parent=47 // pred_region
          %s290 = sand.u32 %s99, 1
          %s291 = scalar_lea.sflag [#allocation4], %s290
          %s292 = sand.u32 %s99, 1
          %s293 = smul.addr %s292, 8
          %s294 = scalar_lea.vmem [#allocation7], %s293
          %296 = dma.done %s291, 128
        $region52: #{tpu_custom_call.1} parent=47 // pred_fallthru
          _
      $region48: #{tpu_custom_call.1} parent=5 // pred_fallthru
        _
    $region6: #{tpu_custom_call.1} parent=1 // loop_footer
      %s21 = sadd.s32 1, %s17
    $region7: #{tpu_custom_call.1} parent=1 // loop_footer_branch
      %16 = sbr.rel target = $region3
    $region8: #{tpu_custom_call.1} parent=1 // loop_exit
      _
    %297 = vsyncpa [#allocation3], 1
    %s298 = scalar_lea.sflag [#allocation3], 1
    %299 = vsyncpa %s298, 1
    %300 = vsyncpa [#allocation6], 1
    %s301 = scalar_lea.sflag [#allocation6], 1
    %302 = vsyncpa %s301, 1
    %303 = vsyncpa [#allocation4], 1
    %s304 = scalar_lea.sflag [#allocation4], 1
    %305 = vsyncpa %s304, 1

</llo_original>
